<compile_context>
chip_gen: v7x
topology: tpu7x:2x2x1
jax: 0.10.0
libtpu: 0.0.40
codegen_flags: <defaults>
</compile_context>

<pallas_src>
import jax
import jax.numpy as jnp
from jax.experimental import pallas as pl
from jax.experimental.pallas import tpu as pltpu


def _round_up(x: int, m: int) -> int:
    return ((x + m - 1) // m) * m


def _pad_to(a, rows, cols):
    r, c = a.shape
    if r == rows and c == cols:
        return a
    return jnp.pad(a, ((0, rows - r), (0, cols - c)))


def _pick_tiles(M: int, K: int, Nout: int):
    """Padded sizes + tile sizes (VMEM budget, lane-density, megacore occupancy)."""
    # N (Cout) axis: as wide as possible so A is streamed from HBM only once.
    Np = _round_up(Nout, 128)
    tn = next(t for t in (512, 384, 256, 128) if Np % t == 0)
    # M axis.
    TM_TARGET = 512
    if M >= TM_TARGET:
        tm = TM_TARGET
        Mp = _round_up(M, tm)
    else:
        Mp = _round_up(M, 16)
        tm = Mp
    # K axis: keep whole (no pad, single reduction step, no scratch) unless huge.
    K_SINGLE_MAX = 1536
    if K <= K_SINGLE_MAX:
        Kp, tk = K, K
    else:
        tk = 512
        Kp = _round_up(K, tk)
    # v7x has 2 TensorCores fed by the parallel grid axes: ensure >= 2 blocks.
    if (Mp // tm) * (Np // tn) < 2 and tm >= 32 and tm % 16 == 0:
        tm //= 2
    return Mp, Kp, Np, tm, tk, tn


def _hswish(y):
    return y * jnp.clip(y + 3.0, 0.0, 6.0) * (1.0 / 6.0)


def _gemm_bias_hswish_kernel(a_ref, b_ref, bias_ref, o_ref):
    """Single K-step: y = A@B + bias; hardswish; store. No scratch needed."""
    y = jnp.dot(a_ref[...], b_ref[...], preferred_element_type=jnp.float32)
    y = y + bias_ref[...]
    o_ref[...] = _hswish(y).astype(o_ref.dtype)


def _gemm_bias_hswish_acc_kernel(a_ref, b_ref, bias_ref, o_ref, acc_ref):
    """Multi K-step: acc initialized with the folded BN bias, hswish at the end."""
    k = pl.program_id(2)

    @pl.when(k == 0)
    def _():
        acc_ref[...] = jnp.broadcast_to(bias_ref[...], acc_ref.shape)

    acc_ref[...] += jnp.dot(a_ref[...], b_ref[...],
                            preferred_element_type=jnp.float32)

    @pl.when(k == pl.num_programs(2) - 1)
    def _():
        o_ref[...] = _hswish(acc_ref[...]).astype(o_ref.dtype)


def conv_bn_hswish(
    x: jax.Array,              # (N, Cin, H, W)  NCHW, as in PyTorch
    weight: jax.Array,         # (Cout, Cin, KH, KW), conv bias=False
    gamma: jax.Array,          # (Cout,) BN weight
    beta: jax.Array,           # (Cout,) BN bias
    running_mean: jax.Array,   # (Cout,)
    running_var: jax.Array,    # (Cout,)
    *,
    stride: int = 1,
    padding: int = 0,
    dilation: int = 1,
    groups: int = 1,
    eps: float = 1e-5,
    mxu_dtype=jnp.bfloat16,
) -> jax.Array:
    """Fused Conv2d + BatchNorm2d(inference) + Hswish. Returns NCHW output."""
    if groups != 1:
        # TODO(synk): grouped / depthwise conv needs a non-im2col kernel.
        raise NotImplementedError("conv_bn_hswish: groups != 1 not supported")

    N, Cin, H, W = x.shape
    Cout, _, KH, KW = weight.shape
    out_dtype = x.dtype

    OH = (H + 2 * padding - dilation * (KH - 1) - 1) // stride + 1
    OW = (W + 2 * padding - dilation * (KW - 1) - 1) // stride + 1

    # ---- Fold BN into conv weights / bias (trace time, free) -----------------
    scale = gamma.astype(jnp.float32) / jnp.sqrt(running_var.astype(jnp.float32) + eps)
    w_eff = weight.astype(jnp.float32) * scale[:, None, None, None]
    b_eff = beta.astype(jnp.float32) - running_mean.astype(jnp.float32) * scale

    # ---- NCHW -> NHWC once, cast to MXU dtype early (halves later passes) ----
    # TODO(synk): accept/return NHWC to drop the boundary transposes entirely.
    x_nhwc = jnp.transpose(x, (0, 2, 3, 1)).astype(mxu_dtype)
    xp = x_nhwc if padding == 0 else jnp.pad(
        x_nhwc, ((0, 0), (padding, padding), (padding, padding), (0, 0)))

    if KH == 1 and KW == 1:
        # Pointwise conv fast path: no im2col, A is just the strided activation.
        xs = xp[:, 0:stride * (OH - 1) + 1:stride,
                0:stride * (OW - 1) + 1:stride, :]
        col = xs.reshape(N * OH * OW, Cin)
    else:
        # TODO(synk): k>1 im2col is still materialized host-side (bf16, single
        # stack+reshape); an in-kernel halo-DMA variant would remove the KH*KW
        # duplication of activation HBM traffic.
        parts = []
        for kh in range(KH):
            h0 = kh * dilation
            h1 = h0 + stride * (OH - 1) + 1
            for kw in range(KW):
                w0 = kw * dilation
                w1 = w0 + stride * (OW - 1) + 1
                parts.append(xp[:, h0:h1:stride, w0:w1:stride, :])
        # (N, OH, OW, Cin, KH*KW) -> K ordered as (Cin, kh, kw), matching
        # w_eff.reshape(Cout, Cin*KH*KW).
        col = jnp.stack(parts, axis=4).reshape(N * OH * OW, Cin * KH * KW)

    b_mat = w_eff.reshape(Cout, Cin * KH * KW).T.astype(mxu_dtype)   # (K, Cout)

    M, K = col.shape
    Mp, Kp, Np, tm, tk, tn = _pick_tiles(M, K, Cout)

    a_p = _pad_to(col, Mp, Kp)
    b_p = _pad_to(b_mat, Kp, Np)
    bias_p = _pad_to(b_eff.reshape(1, Cout), 1, Np).astype(jnp.float32)

    if Kp == tk:
        # Single reduction step: no accumulator scratch, direct store.
        grid = (Mp // tm, Np // tn)
        out_p = pl.pallas_call(
            _gemm_bias_hswish_kernel,
            out_shape=jax.ShapeDtypeStruct((Mp, Np), out_dtype),
            grid_spec=pltpu.PrefetchScalarGridSpec(
                num_scalar_prefetch=0,
                grid=grid,
                in_specs=[
                    pl.BlockSpec((tm, Kp), lambda i, j: (i, 0)),   # A tile
                    pl.BlockSpec((Kp, tn), lambda i, j: (0, j)),   # B tile
                    pl.BlockSpec((1, tn), lambda i, j: (0, j)),    # bias row
                ],
                out_specs=pl.BlockSpec((tm, tn), lambda i, j: (i, j)),
            ),
            compiler_params=pltpu.CompilerParams(
                dimension_semantics=("parallel", "parallel"),
            ),
        )(a_p, b_p, bias_p)
    else:
        grid = (Mp // tm, Np // tn, Kp // tk)
        out_p = pl.pallas_call(
            _gemm_bias_hswish_acc_kernel,
            out_shape=jax.ShapeDtypeStruct((Mp, Np), out_dtype),
            grid_spec=pltpu.PrefetchScalarGridSpec(
                num_scalar_prefetch=0,
                grid=grid,
                in_specs=[
                    pl.BlockSpec((tm, tk), lambda i, j, k: (i, k)),   # A tile
                    pl.BlockSpec((tk, tn), lambda i, j, k: (k, j)),   # B tile
                    pl.BlockSpec((1, tn), lambda i, j, k: (0, j)),    # bias row
                ],
                out_specs=pl.BlockSpec((tm, tn), lambda i, j, k: (i, j)),
                scratch_shapes=[pltpu.VMEM((tm, tn), jnp.float32)],
            ),
            compiler_params=pltpu.CompilerParams(
                dimension_semantics=("parallel", "parallel", "arbitrary"),
            ),
        )(a_p, b_p, bias_p)

    # Strip padding, back to NCHW (PyTorch parity).
    out = out_p[:M, :Cout].reshape(N, OH, OW, Cout).transpose(0, 3, 1, 2)
    return out


def _reference(x, w, gamma, beta, mean, var, *, stride, padding, dilation=1,
               eps=1e-5, mxu_dtype=jnp.bfloat16):
    """Pure-JAX reference with the same BN folding + bf16 input rounding."""
    scale = gamma / jnp.sqrt(var + eps)
    w_eff = w * scale[:, None, None, None]
    b_eff = beta - mean * scale
    xq = x.astype(mxu_dtype).astype(jnp.float32)
    wq = w_eff.astype(mxu_dtype).astype(jnp.float32)
    y = jax.lax.conv_general_dilated(
        xq, wq, window_strides=(stride, stride),
        padding=((padding, padding), (padding, padding)),
        rhs_dilation=(dilation, dilation),
        dimension_numbers=("NCHW", "OIHW", "NCHW"),
    )
    y = y + b_eff[None, :, None, None]
    return y * jnp.clip(y + 3.0, 0.0, 6.0) / 6.0


def _make_inputs(key, N, Cin, H, W, Cout, KH, wscale):
    k1, k2, k3, k4, k5, k6 = jax.random.split(key, 6)
    x = jax.random.normal(k1, (N, Cin, H, W), dtype=jnp.float32)
    w = jax.random.normal(k2, (Cout, Cin, KH, KH), dtype=jnp.float32) * wscale
    gamma = jax.random.uniform(k3, (Cout,), jnp.float32, minval=0.5, maxval=1.5)
    beta = jax.random.normal(k4, (Cout,), dtype=jnp.float32) * 0.1
    mean = jax.random.normal(k5, (Cout,), dtype=jnp.float32) * 0.1
    var = jax.random.uniform(k6, (Cout,), jnp.float32, minval=0.5, maxval=1.5)
    return x, w, gamma, beta, mean, var


def _check(name, key, *, N, Cin, H, W, Cout, KH, stride, padding, wscale=0.1):
    x, w, gamma, beta, mean, var = _make_inputs(key, N, Cin, H, W, Cout, KH, wscale)
    y = conv_bn_hswish(x, w, gamma, beta, mean, var,
                       stride=stride, padding=padding, eps=1e-5)
    y = jax.block_until_ready(y)
    y_ref = _reference(x, w, gamma, beta, mean, var,
                       stride=stride, padding=padding, eps=1e-5)
    assert y.shape == y_ref.shape and y.dtype == y_ref.dtype, name
    assert bool(jnp.allclose(y, y_ref, atol=1e-2, rtol=1e-2)), name
    return y


if __name__ == "__main__":
    key = jax.random.PRNGKey(0)
    k1, k2, k3 = jax.random.split(key, 3)

    # 1) 3x3 conv, stride 1, padding 1 (single-K-step kernel path).
    _check("3x3", k1, N=2, Cin=4, H=16, W=16, Cout=8, KH=3, stride=1, padding=1)

    # 2) 1x1 pointwise conv (no-im2col fast path).
    _check("1x1", k2, N=2, Cin=8, H=8, W=8, Cout=16, KH=1, stride=1, padding=0)

    # 3) 3x3 conv with large Cin (multi-K-step accumulator kernel path).
    _check("3x3-bigK", k3, N=1, Cin=192, H=8, W=8, Cout=32, KH=3,
           stride=1, padding=1, wscale=0.05)

    print("KERNEL_OK")
</pallas_src>

<mosaic_0001>
module attributes {stable_mosaic.version = 11 : i64} {
  func.func @_gemm_bias_hswish_kernel(%arg0: i32, %arg1: i32, %arg2: memref<256x36xbf16, #tpu.memory_space<vmem>>, %arg3: memref<36x128xbf16, #tpu.memory_space<vmem>>, %arg4: memref<1x128xf32, #tpu.memory_space<vmem>>, %arg5: memref<256x128xf32, #tpu.memory_space<vmem>>) attributes {dimension_semantics = [#tpu.dimension_semantics<parallel>, #tpu.dimension_semantics<parallel>], iteration_bounds = array<i64: 2, 1>, scalar_prefetch = 0 : i64, scratch_operands = 0 : i64, tpu.core_type = #tpu.core_type<tc>, window_params = [{transform_indices = @transform_0, window_bounds = array<i64: 256, 36>}, {transform_indices = @transform_1, window_bounds = array<i64: 36, 128>}, {transform_indices = @transform_2, window_bounds = array<i64: 1, 128>}, {transform_indices = @transform_3, window_bounds = array<i64: 256, 128>}]} {
    %c0 = arith.constant 0 : index
    %c0_0 = arith.constant 0 : index
    %0 = vector.load %arg2[%c0, %c0_0] : memref<256x36xbf16, #tpu.memory_space<vmem>>, vector<256x36xbf16>
    %c0_1 = arith.constant 0 : index
    %c0_2 = arith.constant 0 : index
    %1 = vector.load %arg3[%c0_1, %c0_2] : memref<36x128xbf16, #tpu.memory_space<vmem>>, vector<36x128xbf16>
    %cst = arith.constant dense<0.000000e+00> : vector<256x128xf32>
    %2 = tpu.matmul %0, %1, %cst {dimension_numbers = #tpu.dot_dimension_numbers<[1], [0], [0], [1], [0, 0, 1, 1], [], []>} : vector<256x36xbf16>, vector<36x128xbf16>, vector<256x128xf32> -> vector<256x128xf32>
    %c0_3 = arith.constant 0 : index
    %c0_4 = arith.constant 0 : index
    %3 = vector.load %arg4[%c0_3, %c0_4] : memref<1x128xf32, #tpu.memory_space<vmem>>, vector<1x128xf32>
    %4 = vector.broadcast %3 : vector<1x128xf32> to vector<256x128xf32>
    %5 = arith.addf %2, %4 : vector<256x128xf32>
    %cst_5 = arith.constant 3.000000e+00 : f32
    %6 = vector.broadcast %cst_5 : f32 to vector<256x128xf32>
    %7 = arith.addf %5, %6 : vector<256x128xf32>
    %cst_6 = arith.constant 0.000000e+00 : f32
    %cst_7 = arith.constant 6.000000e+00 : f32
    %8 = vector.broadcast %cst_6 : f32 to vector<256x128xf32>
    %9 = arith.maximumf %8, %7 : vector<256x128xf32>
    %10 = vector.broadcast %cst_7 : f32 to vector<256x128xf32>
    %11 = arith.minimumf %10, %9 : vector<256x128xf32>
    %12 = arith.mulf %5, %11 : vector<256x128xf32>
    %cst_8 = arith.constant 0.166666672 : f32
    %13 = vector.broadcast %cst_8 : f32 to vector<256x128xf32>
    %14 = arith.mulf %12, %13 : vector<256x128xf32>
    %c0_9 = arith.constant 0 : index
    %c0_10 = arith.constant 0 : index
    %15 = vector.load %arg5[%c0_9, %c0_10] : memref<256x128xf32, #tpu.memory_space<vmem>>, vector<256x128xf32>
    tpu.vector_store %arg5[%c0_9, %c0_10], %14 {strides = array<i32>} : memref<256x128xf32, #tpu.memory_space<vmem>>, vector<256x128xf32>,
    return
  }
  func.func @transform_0(%arg0: i32, %arg1: i32) -> (i32, i32) {
    %c0_i32 = arith.constant 0 : i32
    %c0_i32_0 = arith.constant 0 : i32
    return %arg0, %c0_i32 : i32, i32
  }
  func.func @transform_1(%arg0: i32, %arg1: i32) -> (i32, i32) {
    %c0_i32 = arith.constant 0 : i32
    %c0_i32_0 = arith.constant 0 : i32
    return %c0_i32, %arg1 : i32, i32
  }
  func.func @transform_2(%arg0: i32, %arg1: i32) -> (i32, i32) {
    %c0_i32 = arith.constant 0 : i32
    %c0_i32_0 = arith.constant 0 : i32
    return %c0_i32, %arg1 : i32, i32
  }
  func.func @transform_3(%arg0: i32, %arg1: i32) -> (i32, i32) {
    %c0_i32 = arith.constant 0 : i32
    return %arg0, %arg1 : i32, i32
  }
}

</mosaic_0001>

<llo_original>
// kernel: tpu_custom_call.1
$region0: #{tpu_custom_call.1}
  #allocation0 [shape = 'u32[]', space=smem, size = 0x4, offset = 0x4, fixed_abs, tag = 'smem constant byte address 0x4 - core index']
  #allocation1 [shape = 'u32[144,128]{1,0:T(1,128)}', space=vmem, size = 0x12000, scoped, tag = 'internal scratch']
  %s0 = inlined_call_operand.vmem [shape: bf16[512,36], index: 0, kind: input, shape index: {}]
  %s1 = inlined_call_operand.vmem [shape: bf16[36,128], index: 1, kind: input, shape index: {}]
  %s2 = inlined_call_operand.vmem [shape: f32[1,128], index: 2, kind: input, shape index: {}]
  %s3 = inlined_call_operand.hbm [shape: f32[512,128], index: 3, kind: output, shape index: {}]
  %s4 = sld [smem:[#allocation0]]
  $region45: #{tpu_custom_call.1} parent=0
    _
  %s6 = ssub.s32 1, %s4
  %s7 = scalar_select 0, %s6, %s4
  $region1: #{tpu_custom_call.1} parent=0
    #allocation2 [shape = 'u8[262144]{0}', space=vmem, size = 0x40000, scoped, tag = 'output window, operand 0']
    #allocation3 [shape = 's32[2]{0}', space=sflag, size = 0x8, scoped, tag = 'scoped memory for tpu_custom_call.1']
    %8 = vsyncpa [#allocation3], 0
    %s9 = scalar_lea.sflag [#allocation3], 1
    %10 = vsyncpa %s9, 0
    loop: start=0, step=1, limit=4
    $region2: #{tpu_custom_call.1} parent=1 // loop_pre_header
      _
    $region3: #{tpu_custom_call.1} parent=1 // loop_header
      %s12 = sphi 0, %s16
      %p13 = scmp.ge.s32.totalorder %s12, 4
      %s19 = sphi 0, %s31
      %s20 = sphi 0, %s27
      %s21 = sphi 0, %s19
      %s22 = sphi 0, %s20
      %s23 = sphi 0, %s21
      %s24 = sphi 0, %s22
      %s34 = sphi 0, %s36
      %s37 = sphi 0, %s34
      %s38 = sphi 0, %s37
      %s54 = sphi 0, %s38
      %s60 = sphi 0, %s62
      %s63 = sphi 0, %s60
      %s64 = sphi 0, %s63
      %s80 = sphi 0, %s64
      %s86 = sphi 0, %s88
      %s89 = sphi 0, %s86
      %s90 = sphi 0, %s89
      %s106 = sphi 0, %s90
      %s114 = sphi 0, %s116
      %s117 = sphi 0, %s114
      %s118 = sphi 0, %s117
      %s134 = sphi 0, %s118
    $region4: #{tpu_custom_call.1} parent=1 // loop_header_branch
      %15 = sbr.rel (%p13) target = $region8
    $region5: #{tpu_custom_call.1} parent=1 // loop_body
      %s17 = ssub.s32 %s12, 1
      %s18 = ssub.s32 %s12, 2
      %s25 = sadd.s32 1, %s20
      %p26 = scmp.ge.s32.totalorder %s25, 1
      %s27 = scalar_select %p26, 0, %s25
      %s28 = sadd.s32 1, %s19
      %s29 = scalar_select %p26, %s28, %s19
      %p30 = scmp.ge.s32.totalorder %s29, 2
      %s31 = scalar_select %p30, 0, %s29
      %s32 = ssub.s32 %s19, %s31
      %p33 = scmp.eq.s32.totalorder %s32, 0
      %s35 = sadd.s32 %s34, 1
      %s36 = scalar_select %p33, %s34, %s35
      %p39 = pneg %p33
      %p40 = scmp.eq.s32.totalorder %s12, 1
      %p41 = por %p39, %p40
      %p42 = scmp.ne.s32.totalorder %s34, %s37
      %p43 = scmp.eq.s32.totalorder %s12, 0
      %p44 = por %p42, %p43
      %p45 = scmp.ne.s32.totalorder %s34, %s37
      %p46 = scmp.eq.s32.totalorder %s17, 1
      %p47 = por %p45, %p46
      %p48 = scmp.ne.s32.totalorder %s37, %s38
      %p49 = scmp.eq.s32.totalorder %s17, 0
      %p50 = por %p48, %p49
      %p51 = scmp.ne.s32.totalorder %s37, %s38
      %p52 = scmp.eq.s32.totalorder %s18, 1
      %p53 = por %p51, %p52
      %p55 = scmp.ne.s32.totalorder %s38, %s54
      %p56 = scmp.eq.s32.totalorder %s18, 0
      %p57 = por %p55, %p56
      %s58 = ssub.s32 %s20, %s27
      %p59 = scmp.eq.s32.totalorder %s58, 0
      %s61 = sadd.s32 %s60, 1
      %s62 = scalar_select %p59, %s60, %s61
      %p65 = pneg %p59
      %p66 = scmp.eq.s32.totalorder %s12, 1
      %p67 = por %p65, %p66
      %p68 = scmp.ne.s32.totalorder %s60, %s63
      %p69 = scmp.eq.s32.totalorder %s12, 0
      %p70 = por %p68, %p69
      %p71 = scmp.ne.s32.totalorder %s60, %s63
      %p72 = scmp.eq.s32.totalorder %s17, 1
      %p73 = por %p71, %p72
      %p74 = scmp.ne.s32.totalorder %s63, %s64
      %p75 = scmp.eq.s32.totalorder %s17, 0
      %p76 = por %p74, %p75
      %p77 = scmp.ne.s32.totalorder %s63, %s64
      %p78 = scmp.eq.s32.totalorder %s18, 1
      %p79 = por %p77, %p78
      %p81 = scmp.ne.s32.totalorder %s64, %s80
      %p82 = scmp.eq.s32.totalorder %s18, 0
      %p83 = por %p81, %p82
      %s84 = ssub.s32 %s20, %s27
      %p85 = scmp.eq.s32.totalorder %s84, 0
      %s87 = sadd.s32 %s86, 1
      %s88 = scalar_select %p85, %s86, %s87
      %p91 = pneg %p85
      %p92 = scmp.eq.s32.totalorder %s12, 1
      %p93 = por %p91, %p92
      %p94 = scmp.ne.s32.totalorder %s86, %s89
      %p95 = scmp.eq.s32.totalorder %s12, 0
      %p96 = por %p94, %p95
      %p97 = scmp.ne.s32.totalorder %s86, %s89
      %p98 = scmp.eq.s32.totalorder %s17, 1
      %p99 = por %p97, %p98
      %p100 = scmp.ne.s32.totalorder %s89, %s90
      %p101 = scmp.eq.s32.totalorder %s17, 0
      %p102 = por %p100, %p101
      %p103 = scmp.ne.s32.totalorder %s89, %s90
      %p104 = scmp.eq.s32.totalorder %s18, 1
      %p105 = por %p103, %p104
      %p107 = scmp.ne.s32.totalorder %s90, %s106
      %p108 = scmp.eq.s32.totalorder %s18, 0
      %p109 = por %p107, %p108
      %s110 = ssub.s32 %s19, %s31
      %s111 = ssub.s32 %s20, %s27
      %s112 = sor.u32 %s110, %s111
      %p113 = scmp.eq.s32.totalorder %s112, 0
      %s115 = sadd.s32 %s114, 1
      %s116 = scalar_select %p113, %s114, %s115
      %p119 = pneg %p113
      %p120 = scmp.eq.s32.totalorder %s12, 1
      %p121 = por %p119, %p120
      %p122 = scmp.ne.s32.totalorder %s114, %s117
      %p123 = scmp.eq.s32.totalorder %s12, 0
      %p124 = por %p122, %p123
      %p125 = scmp.ne.s32.totalorder %s114, %s117
      %p126 = scmp.eq.s32.totalorder %s17, 1
      %p127 = por %p125, %p126
      %p128 = scmp.ne.s32.totalorder %s117, %s118
      %p129 = scmp.eq.s32.totalorder %s17, 0
      %p130 = por %p128, %p129
      %p131 = scmp.ne.s32.totalorder %s117, %s118
      %p132 = scmp.eq.s32.totalorder %s18, 1
      %p133 = por %p131, %p132
      %p135 = scmp.ne.s32.totalorder %s118, %s134
      %p136 = scmp.eq.s32.totalorder %s18, 0
      %p137 = por %p135, %p136
      %p138 = scmp.le.s32.totalorder 1, %s12
      %p139 = scmp.lt.s32.totalorder %s12, 3
      %p140 = pnand %p138, %p139
      %p141 = pneg %p140
      // Predicated region
      $region9: #{tpu_custom_call.1} parent=5 // pred_check
        _
      $region10: #{tpu_custom_call.1} parent=5 // pred_check_branch
        %143 = sbr.rel (%p140) target = $region12
      $region11: #{tpu_custom_call.1} parent=5 // pred_region
        %s144 = ssub.s32 %s12, 1
        // Predicated region
        $region13: #{tpu_custom_call.1} parent=11 // pred_check
          %p145 = pneg %p76
        $region14: #{tpu_custom_call.1} parent=11 // pred_check_branch
          %147 = sbr.rel (%p145) target = $region16
        $region15: #{tpu_custom_call.1} parent=11 // pred_region
          %p148 = scmp.lt.s32.totalorder %s22, 0
          %s149 = scalar_select %p148, %s22, 0
          %s150 = smul.addr %s149, 4
          %s151 = scalar_lea.vmem %s1, %s150
        $region16: #{tpu_custom_call.1} parent=11 // pred_fallthru
          _
        // Predicated region
        $region17: #{tpu_custom_call.1} parent=11 // pred_check
          %p152 = pneg %p102
        $region18: #{tpu_custom_call.1} parent=11 // pred_check_branch
          %154 = sbr.rel (%p152) target = $region20
        $region19: #{tpu_custom_call.1} parent=11 // pred_region
          %p155 = scmp.lt.s32.totalorder %s22, 0
          %s156 = scalar_select %p155, %s22, 0
          %s157 = scalar_lea.vmem %s2, %s156
        $region20: #{tpu_custom_call.1} parent=11 // pred_fallthru
          _
      $region12: #{tpu_custom_call.1} parent=5 // pred_fallthru
        _
      %p158 = scmp.lt.s32.totalorder %s12, 2
      // Predicated region
      $region21: #{tpu_custom_call.1} parent=5 // pred_check
        %p159 = pneg %p158
      $region22: #{tpu_custom_call.1} parent=5 // pred_check_branch
        %161 = sbr.rel (%p159) target = $region24
      $region23: #{tpu_custom_call.1} parent=5 // pred_region
        // Predicated region
        $region25: #{tpu_custom_call.1} parent=23 // pred_check
          %p162 = pneg %p44
        $region26: #{tpu_custom_call.1} parent=23 // pred_check_branch
          %164 = sbr.rel (%p162) target = $region28
        $region27: #{tpu_custom_call.1} parent=23 // pred_region
          %s165 = smul.u32 32, %s19
          %p166 = scmp.lt.s32.totalorder %s165, 63
          %s167 = scalar_select %p166, %s165, 63
          %s168 = smul.addr %s167, 4
          %s169 = scalar_lea.vmem %s0, %s168
          %s170 = smul.u32 32, %s19
        $region28: #{tpu_custom_call.1} parent=23 // pred_fallthru
          _
      $region24: #{tpu_custom_call.1} parent=5 // pred_fallthru
        _
      %p171 = scmp.le.s32.totalorder 1, %s12
      %p172 = scmp.lt.s32.totalorder %s12, 3
      %p173 = pnand %p171, %p172
      %p174 = pneg %p173
      // Predicated region
      $region29: #{tpu_custom_call.1} parent=5 // pred_check
        _
      $region30: #{tpu_custom_call.1} parent=5 // pred_check_branch
        %176 = sbr.rel (%p173) target = $region32
      $region31: #{tpu_custom_call.1} parent=5 // pred_region
        %s177 = ssub.s32 %s12, 1
        %s178 = smul.u32 32, %s21
        %p179 = scmp.lt.s32.totalorder %s178, 63
        %s180 = scalar_select %p179, %s178, 63
        %s181 = smul.addr %s180, 4
        %s182 = scalar_lea.vmem %s0, %s181
        %p183 = pneg %p50
        %p184 = pneg %p47
        %p185 = scmp.lt.s32.totalorder %s22, 0
        %s186 = scalar_select %p185, %s22, 0
        %s187 = smul.addr %s186, 4
        %s188 = scalar_lea.vmem %s1, %s187
        %p189 = pneg %p76
        %p190 = pneg %p73
        %p191 = scmp.lt.s32.totalorder %s22, 0
        %s192 = scalar_select %p191, %s22, 0
        %s193 = scalar_lea.vmem %s2, %s192
        %p194 = pneg %p102
        %p195 = pneg %p99
        %p196 = pneg %p130
        %p197 = pneg %p127
        %s198 = sand.u32 %s117, 1
        %s199 = scalar_lea.sflag [#allocation3], %s198
        %s200 = sand.u32 %s117, 1
        %s201 = smul.addr %s200, 256
        %s202 = scalar_lea.vmem [#allocation2], %s201
        %s203 = smul.u32 32, %s21
        %p204 = scmp.lt.s32.totalorder %s203, 63
        %s205 = scalar_select %p204, %s203, 63
        %s206 = smul.addr %s205, 4
        %s207 = scalar_lea.vmem %s0, %s206
        %s208 = smul.u32 32, %s21
        %p209 = scmp.lt.s32.totalorder %s22, 0
        %s210 = scalar_select %p209, %s22, 0
        %s211 = smul.addr %s210, 4
        %s212 = scalar_lea.vmem %s1, %s211
        %p213 = scmp.lt.s32.totalorder %s22, 0
        %s214 = scalar_select %p213, %s22, 0
        %s215 = scalar_lea.vmem %s2, %s214
        %s216 = smul.u32 32, %s21
        %v218 = vld [vmem:[%s207] sm:$0xf]
        %v219 = vld [vmem:[%s207 + $0x4] sm:$0xf]
        %v220 = vld [vmem:[%s207 + $0x8] sm:$0xf]
        %v221 = vld [vmem:[%s207 + $0xc] sm:$0xf]
        %v222 = vld [vmem:[%s207 + $0x10] sm:$0xf]
        %v223 = vld [vmem:[%s207 + $0x14] sm:$0xf]
        %v224 = vld [vmem:[%s207 + $0x18] sm:$0xf]
        %v225 = vld [vmem:[%s207 + $0x1c] sm:$0xf]
        %v226 = vld [vmem:[%s207 + $0x20] sm:$0xf]
        %v227 = vld [vmem:[%s207 + $0x24] sm:$0xf]
        %v228 = vld [vmem:[%s207 + $0x28] sm:$0xf]
        %v229 = vld [vmem:[%s207 + $0x2c] sm:$0xf]
        %v230 = vld [vmem:[%s207 + $0x30] sm:$0xf]
        %v231 = vld [vmem:[%s207 + $0x34] sm:$0xf]
        %v232 = vld [vmem:[%s207 + $0x38] sm:$0xf]
        %v233 = vld [vmem:[%s207 + $0x3c] sm:$0xf]
        %v234 = vld [vmem:[%s207 + $0x40] sm:$0xf]
        %v235 = vld [vmem:[%s207 + $0x44] sm:$0xf]
        %v236 = vld [vmem:[%s207 + $0x48] sm:$0xf]
        %v237 = vld [vmem:[%s207 + $0x4c] sm:$0xf]
        %v238 = vld [vmem:[%s207 + $0x50] sm:$0xf]
        %v239 = vld [vmem:[%s207 + $0x54] sm:$0xf]
        %v240 = vld [vmem:[%s207 + $0x58] sm:$0xf]
        %v241 = vld [vmem:[%s207 + $0x5c] sm:$0xf]
        %v242 = vld [vmem:[%s207 + $0x60] sm:$0xf]
        %v243 = vld [vmem:[%s207 + $0x64] sm:$0xf]
        %v244 = vld [vmem:[%s207 + $0x68] sm:$0xf]
        %v245 = vld [vmem:[%s207 + $0x6c] sm:$0xf]
        %v246 = vld [vmem:[%s207 + $0x70] sm:$0xf]
        %v247 = vld [vmem:[%s207 + $0x74] sm:$0xf]
        %v248 = vld [vmem:[%s207 + $0x78] sm:$0xf]
        %v249 = vld [vmem:[%s207 + $0x7c] sm:$0xf]
        %v250 = vld [vmem:[%s212] sm:$0xf]
        %v251 = vld [vmem:[%s212 + $0x4] sm:$0xf]
        %v252 = vld [vmem:[%s212 + $0x8] sm:$0xf]
        %v253 = vld [vmem:[%s212 + $0xc] sm:$0xf]
        %v254 = vld [vmem:[%s212 + $0x10] sm:$0x3]
        %v255 = vld [vmem:[%s215] sm:$0x1]
        %v257 = vlaneseq
        %v258 = vshrl.u32 %v257, 7
        %v259 = vsub.s32 0, %v258
        %v260 = vrot.slane %v255, %v259
        %v294 = vunpack.c.l.b16 %v218
        %v295 = vunpack.c.l.b16 %v219
        %v296 = vunpack.c.l.b16 %v220
        %v297 = vunpack.c.l.b16 %v221
        %v298 = vunpack.c.l.b16 %v222
        %v299 = vunpack.c.l.b16 %v223
        %v300 = vunpack.c.l.b16 %v224
        %v301 = vunpack.c.l.b16 %v225
        %v302 = vunpack.c.l.b16 %v226
        %v303 = vunpack.c.l.b16 %v227
        %v304 = vunpack.c.l.b16 %v228
        %v305 = vunpack.c.l.b16 %v229
        %v306 = vunpack.c.l.b16 %v230
        %v307 = vunpack.c.l.b16 %v231
        %v308 = vunpack.c.l.b16 %v232
        %v309 = vunpack.c.l.b16 %v233
        %v310 = vunpack.c.l.b16 %v234
        %v311 = vunpack.c.l.b16 %v235
        %v312 = vunpack.c.l.b16 %v236
        %v313 = vunpack.c.l.b16 %v237
        %v314 = vunpack.c.l.b16 %v238
        %v315 = vunpack.c.l.b16 %v239
        %v316 = vunpack.c.l.b16 %v240
        %v317 = vunpack.c.l.b16 %v241
        %v318 = vunpack.c.l.b16 %v242
        %v319 = vunpack.c.l.b16 %v243
        %v320 = vunpack.c.l.b16 %v244
        %v321 = vunpack.c.l.b16 %v245
        %v322 = vunpack.c.l.b16 %v246
        %v323 = vunpack.c.l.b16 %v247
        %v324 = vunpack.c.l.b16 %v248
        %v325 = vunpack.c.l.b16 %v249
        %v326 = vpack.c.b16 %v295, %v294
        %v327 = vpack.c.b16 %v297, %v296
        %v328 = vpack.c.b16 %v299, %v298
        %v329 = vpack.c.b16 %v301, %v300
        %v330 = vpack.c.b16 %v303, %v302
        %v331 = vpack.c.b16 %v305, %v304
        %v332 = vpack.c.b16 %v307, %v306
        %v333 = vpack.c.b16 %v309, %v308
        %v334 = vpack.c.b16 %v311, %v310
        %v335 = vpack.c.b16 %v313, %v312
        %v336 = vpack.c.b16 %v315, %v314
        %v337 = vpack.c.b16 %v317, %v316
        %v338 = vpack.c.b16 %v319, %v318
        %v339 = vpack.c.b16 %v321, %v320
        %v340 = vpack.c.b16 %v323, %v322
        %v341 = vpack.c.b16 %v325, %v324
        %v347 = vunpack.c.l.b16 %v250
        %v348 = vunpack.c.l.b16 %v251
        %v349 = vunpack.c.l.b16 %v252
        %v350 = vunpack.c.l.b16 %v253
        %v351 = vunpack.c.l.b16 %v254
        %v352 = vpack.c.b16 %v348, %v347
        %v353 = vpack.c.b16 %v350, %v349
        %v354 = vpack.c.b16 %v351, %v351
        %vm357 = vcmask 293888
        %v359 = vsel %vm357, %v326, 0
        %v362 = vsel %vm357, %v327, 0
        %v365 = vsel %vm357, %v328, 0
        %v368 = vsel %vm357, %v329, 0
        %v371 = vsel %vm357, %v330, 0
        %v374 = vsel %vm357, %v331, 0
        %v377 = vsel %vm357, %v332, 0
        %v380 = vsel %vm357, %v333, 0
        %v383 = vsel %vm357, %v334, 0
        %v386 = vsel %vm357, %v335, 0
        %v389 = vsel %vm357, %v336, 0
        %v392 = vsel %vm357, %v337, 0
        %v395 = vsel %vm357, %v338, 0
        %v398 = vsel %vm357, %v339, 0
        %v401 = vsel %vm357, %v340, 0
        %v404 = vsel %vm357, %v341, 0
        %vm406 = vcmask 1041408
        %v408 = vsel %vm406, %v354, 0
        %410 = vmatprep.subr.bf16.mxu0 0
        %411 = vmatpush1.bf16.msra.mxu0 %v352
        %412 = vmatprep.subr.bf16.mxu0 0
        %413 = vmatpush1.bf16.msra.mxu0 %v353
        %414 = vmatprep.subr.bf16.mxu0 0
        %415 = vmatpush1.bf16.msra.mxu0 %v408
        %416 = vmatprep.subr.bf16.mxu0 0
        %417 = vmatpush1.bf16.msra.mxu0 0
        %418 = vmatprep.subr.bf16.mxu0 0
        %419 = vmatpush1.bf16.msra.mxu0 0
        %420 = vmatprep.subr.bf16.mxu0 0
        %421 = vmatpush1.bf16.msra.mxu0 0
        %422 = vmatprep.subr.bf16.mxu0 0
        %423 = vmatpush1.bf16.msra.mxu0 0
        %424 = vmatprep.subr.bf16.mxu0 0
        %425 = vmatpush1.bf16.msra.mxu0 0
        %426 = vmatprep.subr.bf16.mxu0 0
        %427 = vmatpush1.bf16.msra.mxu0 0
        %428 = vmatprep.subr.bf16.mxu0 0
        %429 = vmatpush1.bf16.msra.mxu0 0
        %430 = vmatprep.subr.bf16.mxu0 0
        %431 = vmatpush1.bf16.msra.mxu0 0
        %432 = vmatprep.subr.bf16.mxu0 0
        %433 = vmatpush1.bf16.msra.mxu0 0
        %434 = vmatprep.subr.bf16.mxu0 0
        %435 = vmatpush1.bf16.msra.mxu0 0
        %436 = vmatprep.subr.bf16.mxu0 0
        %437 = vmatpush1.bf16.msra.mxu0 0
        %438 = vmatprep.subr.bf16.mxu0 0
        %439 = vmatpush1.bf16.msra.mxu0 0
        %440 = vmatprep.subr.bf16.mxu0 0
        %441 = vmatpush1.bf16.msra.mxu0 0
        %442 = vmatprep.mubr.bf16.mxu0 0
        %443 = vmatmul.mubr.bf16.gmra.mrb[0].mxu0 %v359
        %v444 = vpop.f32.mrb[0].mxu0
        %v445 = vadd.f32 %v260, %v444
        %v446 = vpop.f32.mrb[0].mxu0
        %v447 = vpop.f32.mrb[0].mxu0
        %v448 = vadd.f32 %v260, %v447
        %v449 = vpop.f32.mrb[0].mxu0
        %450 = vmatprep.mubr.bf16.mxu0 0
        %451 = vmatmul.mubr.bf16.gmra.mrb[0].mxu0 %v362
        %v452 = vpop.f32.mrb[0].mxu0
        %v453 = vadd.f32 %v260, %v452
        %v454 = vpop.f32.mrb[0].mxu0
        %v455 = vpop.f32.mrb[0].mxu0
        %v456 = vadd.f32 %v260, %v455
        %v457 = vpop.f32.mrb[0].mxu0
        %458 = vmatprep.mubr.bf16.mxu0 0
        %459 = vmatmul.mubr.bf16.gmra.mrb[0].mxu0 %v365
        %v460 = vpop.f32.mrb[0].mxu0
        %v461 = vadd.f32 %v260, %v460
        %v462 = vpop.f32.mrb[0].mxu0
        %v463 = vpop.f32.mrb[0].mxu0
        %v464 = vadd.f32 %v260, %v463
        %v465 = vpop.f32.mrb[0].mxu0
        %466 = vmatprep.mubr.bf16.mxu0 0
        %467 = vmatmul.mubr.bf16.gmra.mrb[0].mxu0 %v368
        %v468 = vpop.f32.mrb[0].mxu0
        %v469 = vadd.f32 %v260, %v468
        %v470 = vpop.f32.mrb[0].mxu0
        %v471 = vpop.f32.mrb[0].mxu0
        %v472 = vadd.f32 %v260, %v471
        %v473 = vpop.f32.mrb[0].mxu0
        %474 = vmatprep.mubr.bf16.mxu0 0
        %475 = vmatmul.mubr.bf16.gmra.mrb[0].mxu0 %v371
        %v476 = vpop.f32.mrb[0].mxu0
        %v477 = vadd.f32 %v260, %v476
        %v478 = vpop.f32.mrb[0].mxu0
        %v479 = vpop.f32.mrb[0].mxu0
        %v480 = vadd.f32 %v260, %v479
        %v481 = vpop.f32.mrb[0].mxu0
        %482 = vmatprep.mubr.bf16.mxu0 0
        %483 = vmatmul.mubr.bf16.gmra.mrb[0].mxu0 %v374
        %v484 = vpop.f32.mrb[0].mxu0
        %v485 = vadd.f32 %v260, %v484
        %v486 = vpop.f32.mrb[0].mxu0
        %v487 = vpop.f32.mrb[0].mxu0
        %v488 = vadd.f32 %v260, %v487
        %v489 = vpop.f32.mrb[0].mxu0
        %490 = vmatprep.mubr.bf16.mxu0 0
        %491 = vmatmul.mubr.bf16.gmra.mrb[0].mxu0 %v377
        %v492 = vpop.f32.mrb[0].mxu0
        %v493 = vadd.f32 %v260, %v492
        %v494 = vpop.f32.mrb[0].mxu0
        %v495 = vpop.f32.mrb[0].mxu0
        %v496 = vadd.f32 %v260, %v495
        %v497 = vpop.f32.mrb[0].mxu0
        %498 = vmatprep.mubr.bf16.mxu0 0
        %499 = vmatmul.mubr.bf16.gmra.mrb[0].mxu0 %v380
        %v500 = vpop.f32.mrb[0].mxu0
        %v501 = vadd.f32 %v260, %v500
        %v502 = vpop.f32.mrb[0].mxu0
        %v503 = vpop.f32.mrb[0].mxu0
        %v504 = vadd.f32 %v260, %v503
        %v505 = vpop.f32.mrb[0].mxu0
        %506 = vmatprep.mubr.bf16.mxu0 0
        %507 = vmatmul.mubr.bf16.gmra.mrb[0].mxu0 %v383
        %v508 = vpop.f32.mrb[0].mxu0
        %v509 = vadd.f32 %v260, %v508
        %v510 = vpop.f32.mrb[0].mxu0
        %v511 = vpop.f32.mrb[0].mxu0
        %v512 = vadd.f32 %v260, %v511
        %v513 = vpop.f32.mrb[0].mxu0
        %514 = vmatprep.mubr.bf16.mxu0 0
        %515 = vmatmul.mubr.bf16.gmra.mrb[0].mxu0 %v386
        %v516 = vpop.f32.mrb[0].mxu0
        %v517 = vadd.f32 %v260, %v516
        %v518 = vpop.f32.mrb[0].mxu0
        %v519 = vpop.f32.mrb[0].mxu0
        %v520 = vadd.f32 %v260, %v519
        %v521 = vpop.f32.mrb[0].mxu0
        %522 = vmatprep.mubr.bf16.mxu0 0
        %523 = vmatmul.mubr.bf16.gmra.mrb[0].mxu0 %v389
        %v524 = vpop.f32.mrb[0].mxu0
        %v525 = vadd.f32 %v260, %v524
        %v526 = vpop.f32.mrb[0].mxu0
        %v527 = vpop.f32.mrb[0].mxu0
        %v528 = vadd.f32 %v260, %v527
        %v529 = vpop.f32.mrb[0].mxu0
        %530 = vmatprep.mubr.bf16.mxu0 0
        %531 = vmatmul.mubr.bf16.gmra.mrb[0].mxu0 %v392
        %v532 = vpop.f32.mrb[0].mxu0
        %v533 = vadd.f32 %v260, %v532
        %v534 = vpop.f32.mrb[0].mxu0
        %v535 = vpop.f32.mrb[0].mxu0
        %v536 = vadd.f32 %v260, %v535
        %v537 = vpop.f32.mrb[0].mxu0
        %538 = vmatprep.mubr.bf16.mxu0 0
        %539 = vmatmul.mubr.bf16.gmra.mrb[0].mxu0 %v395
        %v540 = vpop.f32.mrb[0].mxu0
        %v541 = vadd.f32 %v260, %v540
        %v542 = vpop.f32.mrb[0].mxu0
        %v543 = vpop.f32.mrb[0].mxu0
        %v544 = vadd.f32 %v260, %v543
        %v545 = vpop.f32.mrb[0].mxu0
        %546 = vmatprep.mubr.bf16.mxu0 0
        %547 = vmatmul.mubr.bf16.gmra.mrb[0].mxu0 %v398
        %v548 = vpop.f32.mrb[0].mxu0
        %v549 = vadd.f32 %v260, %v548
        %v550 = vpop.f32.mrb[0].mxu0
        %v551 = vpop.f32.mrb[0].mxu0
        %v552 = vadd.f32 %v260, %v551
        %v553 = vpop.f32.mrb[0].mxu0
        %554 = vmatprep.mubr.bf16.mxu0 0
        %555 = vmatmul.mubr.bf16.gmra.mrb[0].mxu0 %v401
        %v556 = vpop.f32.mrb[0].mxu0
        %v557 = vadd.f32 %v260, %v556
        %v558 = vpop.f32.mrb[0].mxu0
        %v559 = vpop.f32.mrb[0].mxu0
        %v560 = vadd.f32 %v260, %v559
        %v561 = vpop.f32.mrb[0].mxu0
        %562 = vmatprep.mubr.bf16.mxu0 0
        %563 = vmatmul.mubr.bf16.gmra.mrb[0].mxu0 %v404
        %v564 = vpop.f32.mrb[0].mxu0
        %v565 = vadd.f32 %v260, %v564
        %v566 = vpop.f32.mrb[0].mxu0
        %v567 = vpop.f32.mrb[0].mxu0
        %v568 = vadd.f32 %v260, %v567
        %v569 = vpop.f32.mrb[0].mxu0
        %570 = vdwg.mxu0
        %v571 = vadd.f32 %v445, 3.0
        %v572 = vadd.f32 %v448, 3.0
        %v573 = vadd.f32 %v453, 3.0
        %v574 = vadd.f32 %v456, 3.0
        %v575 = vadd.f32 %v461, 3.0
        %v576 = vadd.f32 %v464, 3.0
        %v577 = vadd.f32 %v469, 3.0
        %v578 = vadd.f32 %v472, 3.0
        %v579 = vadd.f32 %v477, 3.0
        %v580 = vadd.f32 %v480, 3.0
        %v581 = vadd.f32 %v485, 3.0
        %v582 = vadd.f32 %v488, 3.0
        %v583 = vadd.f32 %v493, 3.0
        %v584 = vadd.f32 %v496, 3.0
        %v585 = vadd.f32 %v501, 3.0
        %v586 = vadd.f32 %v504, 3.0
        %v587 = vadd.f32 %v509, 3.0
        %v588 = vadd.f32 %v512, 3.0
        %v589 = vadd.f32 %v517, 3.0
        %v590 = vadd.f32 %v520, 3.0
        %v591 = vadd.f32 %v525, 3.0
        %v592 = vadd.f32 %v528, 3.0
        %v593 = vadd.f32 %v533, 3.0
        %v594 = vadd.f32 %v536, 3.0
        %v595 = vadd.f32 %v541, 3.0
        %v596 = vadd.f32 %v544, 3.0
        %v597 = vadd.f32 %v549, 3.0
        %v598 = vadd.f32 %v552, 3.0
        %v599 = vadd.f32 %v557, 3.0
        %v600 = vadd.f32 %v560, 3.0
        %v601 = vadd.f32 %v565, 3.0
        %v602 = vadd.f32 %v568, 3.0
        %v603 = vmax.f32 %v571, 0.0
        %v604 = vmax.f32 %v572, 0.0
        %v605 = vmax.f32 %v573, 0.0
        %v606 = vmax.f32 %v574, 0.0
        %v607 = vmax.f32 %v575, 0.0
        %v608 = vmax.f32 %v576, 0.0
        %v609 = vmax.f32 %v577, 0.0
        %v610 = vmax.f32 %v578, 0.0
        %v611 = vmax.f32 %v579, 0.0
        %v612 = vmax.f32 %v580, 0.0
        %v613 = vmax.f32 %v581, 0.0
        %v614 = vmax.f32 %v582, 0.0
        %v615 = vmax.f32 %v583, 0.0
        %v616 = vmax.f32 %v584, 0.0
        %v617 = vmax.f32 %v585, 0.0
        %v618 = vmax.f32 %v586, 0.0
        %v619 = vmax.f32 %v587, 0.0
        %v620 = vmax.f32 %v588, 0.0
        %v621 = vmax.f32 %v589, 0.0
        %v622 = vmax.f32 %v590, 0.0
        %v623 = vmax.f32 %v591, 0.0
        %v624 = vmax.f32 %v592, 0.0
        %v625 = vmax.f32 %v593, 0.0
        %v626 = vmax.f32 %v594, 0.0
        %v627 = vmax.f32 %v595, 0.0
        %v628 = vmax.f32 %v596, 0.0
        %v629 = vmax.f32 %v597, 0.0
        %v630 = vmax.f32 %v598, 0.0
        %v631 = vmax.f32 %v599, 0.0
        %v632 = vmax.f32 %v600, 0.0
        %v633 = vmax.f32 %v601, 0.0
        %v634 = vmax.f32 %v602, 0.0
        %v635 = vmin.f32 %v603, 6.0
        %v636 = vmin.f32 %v604, 6.0
        %v637 = vmin.f32 %v605, 6.0
        %v638 = vmin.f32 %v606, 6.0
        %v639 = vmin.f32 %v607, 6.0
        %v640 = vmin.f32 %v608, 6.0
        %v641 = vmin.f32 %v609, 6.0
        %v642 = vmin.f32 %v610, 6.0
        %v643 = vmin.f32 %v611, 6.0
        %v644 = vmin.f32 %v612, 6.0
        %v645 = vmin.f32 %v613, 6.0
        %v646 = vmin.f32 %v614, 6.0
        %v647 = vmin.f32 %v615, 6.0
        %v648 = vmin.f32 %v616, 6.0
        %v649 = vmin.f32 %v617, 6.0
        %v650 = vmin.f32 %v618, 6.0
        %v651 = vmin.f32 %v619, 6.0
        %v652 = vmin.f32 %v620, 6.0
        %v653 = vmin.f32 %v621, 6.0
        %v654 = vmin.f32 %v622, 6.0
        %v655 = vmin.f32 %v623, 6.0
        %v656 = vmin.f32 %v624, 6.0
        %v657 = vmin.f32 %v625, 6.0
        %v658 = vmin.f32 %v626, 6.0
        %v659 = vmin.f32 %v627, 6.0
        %v660 = vmin.f32 %v628, 6.0
        %v661 = vmin.f32 %v629, 6.0
        %v662 = vmin.f32 %v630, 6.0
        %v663 = vmin.f32 %v631, 6.0
        %v664 = vmin.f32 %v632, 6.0
        %v665 = vmin.f32 %v633, 6.0
        %v666 = vmin.f32 %v634, 6.0
        %v667 = vmul.f32 %v445, %v635
        %v668 = vmul.f32 %v448, %v636
        %v669 = vmul.f32 %v453, %v637
        %v670 = vmul.f32 %v456, %v638
        %v671 = vmul.f32 %v461, %v639
        %v672 = vmul.f32 %v464, %v640
        %v673 = vmul.f32 %v469, %v641
        %v674 = vmul.f32 %v472, %v642
        %v675 = vmul.f32 %v477, %v643
        %v676 = vmul.f32 %v480, %v644
        %v677 = vmul.f32 %v485, %v645
        %v678 = vmul.f32 %v488, %v646
        %v679 = vmul.f32 %v493, %v647
        %v680 = vmul.f32 %v496, %v648
        %v681 = vmul.f32 %v501, %v649
        %v682 = vmul.f32 %v504, %v650
        %v683 = vmul.f32 %v509, %v651
        %v684 = vmul.f32 %v512, %v652
        %v685 = vmul.f32 %v517, %v653
        %v686 = vmul.f32 %v520, %v654
        %v687 = vmul.f32 %v525, %v655
        %v688 = vmul.f32 %v528, %v656
        %v689 = vmul.f32 %v533, %v657
        %v690 = vmul.f32 %v536, %v658
        %v691 = vmul.f32 %v541, %v659
        %v692 = vmul.f32 %v544, %v660
        %v693 = vmul.f32 %v549, %v661
        %v694 = vmul.f32 %v552, %v662
        %v695 = vmul.f32 %v557, %v663
        %v696 = vmul.f32 %v560, %v664
        %v697 = vmul.f32 %v565, %v665
        %v698 = vmul.f32 %v568, %v666
        %v699 = vmul.f32 %v667, 0.16666667
        %v700 = vmul.f32 %v668, 0.16666667
        %v701 = vmul.f32 %v669, 0.16666667
        %v702 = vmul.f32 %v670, 0.16666667
        %v703 = vmul.f32 %v671, 0.16666667
        %v704 = vmul.f32 %v672, 0.16666667
        %v705 = vmul.f32 %v673, 0.16666667
        %v706 = vmul.f32 %v674, 0.16666667
        %v707 = vmul.f32 %v675, 0.16666667
        %v708 = vmul.f32 %v676, 0.16666667
        %v709 = vmul.f32 %v677, 0.16666667
        %v710 = vmul.f32 %v678, 0.16666667
        %v711 = vmul.f32 %v679, 0.16666667
        %v712 = vmul.f32 %v680, 0.16666667
        %v713 = vmul.f32 %v681, 0.16666667
        %v714 = vmul.f32 %v682, 0.16666667
        %v715 = vmul.f32 %v683, 0.16666667
        %v716 = vmul.f32 %v684, 0.16666667
        %v717 = vmul.f32 %v685, 0.16666667
        %v718 = vmul.f32 %v686, 0.16666667
        %v719 = vmul.f32 %v687, 0.16666667
        %v720 = vmul.f32 %v688, 0.16666667
        %v721 = vmul.f32 %v689, 0.16666667
        %v722 = vmul.f32 %v690, 0.16666667
        %v723 = vmul.f32 %v691, 0.16666667
        %v724 = vmul.f32 %v692, 0.16666667
        %v725 = vmul.f32 %v693, 0.16666667
        %v726 = vmul.f32 %v694, 0.16666667
        %v727 = vmul.f32 %v695, 0.16666667
        %v728 = vmul.f32 %v696, 0.16666667
        %v729 = vmul.f32 %v697, 0.16666667
        %v730 = vmul.f32 %v698, 0.16666667
        %731 = vst [vmem:[%s202] sm:$0xff] %v699
        %732 = vst [vmem:[%s202 + $0x8] sm:$0xff] %v700
        %733 = vst [vmem:[%s202 + $0x10] sm:$0xff] %v701
        %734 = vst [vmem:[%s202 + $0x18] sm:$0xff] %v702
        %735 = vst [vmem:[%s202 + $0x20] sm:$0xff] %v703
        %736 = vst [vmem:[%s202 + $0x28] sm:$0xff] %v704
        %737 = vst [vmem:[%s202 + $0x30] sm:$0xff] %v705
        %738 = vst [vmem:[%s202 + $0x38] sm:$0xff] %v706
        %739 = vst [vmem:[%s202 + $0x40] sm:$0xff] %v707
        %740 = vst [vmem:[%s202 + $0x48] sm:$0xff] %v708
        %741 = vst [vmem:[%s202 + $0x50] sm:$0xff] %v709
        %742 = vst [vmem:[%s202 + $0x58] sm:$0xff] %v710
        %743 = vst [vmem:[%s202 + $0x60] sm:$0xff] %v711
        %744 = vst [vmem:[%s202 + $0x68] sm:$0xff] %v712
        %745 = vst [vmem:[%s202 + $0x70] sm:$0xff] %v713
        %746 = vst [vmem:[%s202 + $0x78] sm:$0xff] %v714
        %747 = vst [vmem:[%s202 + $0x80] sm:$0xff] %v715
        %748 = vst [vmem:[%s202 + $0x88] sm:$0xff] %v716
        %749 = vst [vmem:[%s202 + $0x90] sm:$0xff] %v717
        %750 = vst [vmem:[%s202 + $0x98] sm:$0xff] %v718
        %751 = vst [vmem:[%s202 + $0xa0] sm:$0xff] %v719
        %752 = vst [vmem:[%s202 + $0xa8] sm:$0xff] %v720
        %753 = vst [vmem:[%s202 + $0xb0] sm:$0xff] %v721
        %754 = vst [vmem:[%s202 + $0xb8] sm:$0xff] %v722
        %755 = vst [vmem:[%s202 + $0xc0] sm:$0xff] %v723
        %756 = vst [vmem:[%s202 + $0xc8] sm:$0xff] %v724
        %757 = vst [vmem:[%s202 + $0xd0] sm:$0xff] %v725
        %758 = vst [vmem:[%s202 + $0xd8] sm:$0xff] %v726
        %759 = vst [vmem:[%s202 + $0xe0] sm:$0xff] %v727
        %760 = vst [vmem:[%s202 + $0xe8] sm:$0xff] %v728
        %761 = vst [vmem:[%s202 + $0xf0] sm:$0xff] %v729
        %762 = vst [vmem:[%s202 + $0xf8] sm:$0xff] %v730
        %s763 = sand.u32 %s117, 1
        %s764 = scalar_lea.sflag [#allocation3], %s763
        %s765 = sand.u32 %s117, 1
        %s766 = smul.addr %s765, 256
        %s767 = scalar_lea.vmem [#allocation2], %s766
        // Predicated region
        $region33: #{tpu_custom_call.1} parent=31 // pred_check
          %p768 = pneg %p127
        $region34: #{tpu_custom_call.1} parent=31 // pred_check_branch
          %770 = sbr.rel (%p768) target = $region36
        $region35: #{tpu_custom_call.1} parent=31 // pred_region
          %s771 = smul.u32 32, %s21
          %s773 = ssub.s32 4096, 4096
          %774 = vsyncadd %s764, %s773
          %s775 = sadd.s32 %s22, %s771
          %s776 = smul.addr %s775, 128
          %s777 = scalar_lea.hbm %s3, %s776
          %s778 = sshll.u32 %s767, 4
          %s779 = int_to_ptr.vmem [resolvable:$true] %s778
          %784 = dma.vmem_to_hbm [thread:$0]  %s779, 4096, %s777, %s764, 128, 128, 8
        $region36: #{tpu_custom_call.1} parent=31 // pred_fallthru
          _
      $region32: #{tpu_custom_call.1} parent=5 // pred_fallthru
        _
      %p785 = scmp.le.s32.totalorder 2, %s12
      // Predicated region
      $region37: #{tpu_custom_call.1} parent=5 // pred_check
        %p786 = pneg %p785
      $region38: #{tpu_custom_call.1} parent=5 // pred_check_branch
        %788 = sbr.rel (%p786) target = $region40
      $region39: #{tpu_custom_call.1} parent=5 // pred_region
        %s789 = ssub.s32 %s12, 2
        // Predicated region
        $region41: #{tpu_custom_call.1} parent=39 // pred_check
          %p790 = pneg %p133
        $region42: #{tpu_custom_call.1} parent=39 // pred_check_branch
          %792 = sbr.rel (%p790) target = $region44
        $region43: #{tpu_custom_call.1} parent=39 // pred_region
          %s793 = sand.u32 %s118, 1
          %s794 = scalar_lea.sflag [#allocation3], %s793
          %s795 = sand.u32 %s118, 1
          %s796 = smul.addr %s795, 256
          %s797 = scalar_lea.vmem [#allocation2], %s796
          %798 = dma.done %s794, 4096
        $region44: #{tpu_custom_call.1} parent=39 // pred_fallthru
          _
      $region40: #{tpu_custom_call.1} parent=5 // pred_fallthru
        _
    $region6: #{tpu_custom_call.1} parent=1 // loop_footer
      %s16 = sadd.s32 1, %s12
    $region7: #{tpu_custom_call.1} parent=1 // loop_footer_branch
      %11 = sbr.rel target = $region3
    $region8: #{tpu_custom_call.1} parent=1 // loop_exit
      _
    %799 = vsyncpa [#allocation3], 1
    %s800 = scalar_lea.sflag [#allocation3], 1
    %801 = vsyncpa %s800, 1

</llo_original>
